<compile_context>
chip_gen: v6e
topology: v6e:2x2x1
jax: 0.10.0
libtpu: 0.0.40
codegen_flags: <defaults>
</compile_context>

<pallas_src>
import heapq

import numpy as np
import jax
import jax.numpy as jnp
from jax.experimental import pallas as pl
from jax.experimental.pallas import tpu as pltpu


_LANE = 128                      # TPU lane width
_TARGET_TILE_BYTES = 4 * 1024 * 1024   # per-step input bytes target (amortize ~0.35us/step)


def _round_up(n, m):
    return ((int(n) + m - 1) // m) * m


def _vmem_budget_bytes():
    """Scoped-VMEM budget: generous on v5e/v6e (128 MiB physical), conservative
    on v7x / unknown chips (64 MiB physical on v7x)."""
    try:
        kind = jax.devices()[0].device_kind.lower()
    except Exception:
        kind = ""
    if ("v5" in kind) or ("v6" in kind):
        return 64 * 1024 * 1024
    return 32 * 1024 * 1024


def _pick_tile(C):
    """Lane-axis tile, multiple of 128, sized by bytes and capped so the
    double-buffered VMEM footprint stays inside the scoped budget."""
    rows_in = C + 2
    rows_out = 2
    tile = _TARGET_TILE_BYTES // (rows_in * 4)
    tile = max(_LANE, (tile // _LANE) * _LANE)
    budget = _vmem_budget_bytes()
    # double-buffered in + out footprint: 2 * (rows_in + rows_out) * tile * 4 B
    max_tile = (budget // 2) // (2 * (rows_in + rows_out) * 4)
    max_tile = max(_LANE, (max_tile // _LANE) * _LANE)
    return min(tile, max_tile)


# --------------------------------------------------------------------------
# Pallas kernel: fused per-vertex squared feature norm + boundary flag.
# Lane-dense layout: vertices live on the 128-lane axis, channels/coords on
# sublanes.  Single input slab, single output slab.
# --------------------------------------------------------------------------
def _make_fused_kernel(C, epsilon):
    eps = float(epsilon)
    hi = 1.0 - eps

    def kernel(in_ref, out_ref):
        x = in_ref[...]                              # (C+2, tile) f32
        feats = x[:C, :]                             # (C, tile)
        coords = x[C:, :]                            # (2, tile)
        vnorm = jnp.sum(feats * feats, axis=0, keepdims=True)          # (1, tile)
        bnd = jnp.any((coords < eps) | (coords > hi), axis=0, keepdims=True)
        out_ref[...] = jnp.concatenate([vnorm, bnd.astype(jnp.float32)], axis=0)

    return kernel


_kernel_cache = {}
_staging_cache = {}


def _get_fused_fn(C, V_pad, tile, epsilon):
    key = (int(C), int(V_pad), int(tile), float(epsilon))
    fn = _kernel_cache.get(key)
    if fn is not None:
        return fn

    rows_in = C + 2
    grid = (V_pad // tile,)     # exact: V_pad is a multiple of tile
    call = pl.pallas_call(
        _make_fused_kernel(C, epsilon),
        out_shape=jax.ShapeDtypeStruct((2, V_pad), jnp.float32),
        grid=grid,
        in_specs=[pl.BlockSpec((rows_in, tile), lambda i: (0, i))],
        out_specs=pl.BlockSpec((2, tile), lambda i: (0, i)),
        compiler_params=pltpu.CompilerParams(
            # TODO(synk): verify in xprof that both v7x TensorCores are engaged;
            # if not, switch this axis to pltpu.CORE_PARALLEL.
            dimension_semantics=("parallel",),
            vmem_limit_bytes=_vmem_budget_bytes()),
    )
    fn = jax.jit(call)
    _kernel_cache[key] = fn
    return fn


def _get_staging(rows, cols):
    key = (int(rows), int(cols))
    buf = _staging_cache.get(key)
    if buf is None:
        buf = np.empty((rows, cols), np.float32)
        _staging_cache[key] = buf
    return buf


def compute_vertex_metrics_batched(images, vss, epsilon):
    """Batched hot path for a list of meshes sharing channel count C and epsilon.

    images: list of (V_i, C) float arrays; vss: list of (V_i, 2) float arrays.
    Returns list of (vnorm (V_i,) f32, vertex_boundary (V_i,) bool) numpy pairs.
    """
    if not images:
        return []
    epsilon = float(epsilon)
    assert epsilon < 0.5, "padded lanes use coords=0.5 sentinel; requires epsilon < 0.5"

    C = int(images[0].shape[1])
    Vs = [int(im.shape[0]) for im in images]
    total_V = sum(Vs)

    tile = _pick_tile(C)
    tile = min(tile, _round_up(total_V, _LANE))     # don't exceed (padded) problem size
    V_pad = _round_up(total_V, tile)                # pad to a tile multiple (not pow2)
    rows = C + 2

    buf = _get_staging(rows, V_pad)
    off = 0
    for im, vs in zip(images, vss):
        v = im.shape[0]
        buf[:C, off:off + v] = np.asarray(im, np.float32).T
        buf[C:, off:off + v] = np.asarray(vs, np.float32).T
        off += v
    if off < V_pad:                                  # pad tail: vnorm 0, not boundary
        buf[:C, off:] = 0.0
        buf[C:, off:] = 0.5

    fn = _get_fused_fn(C, V_pad, tile, epsilon)
    out = fn(buf)                                    # (2, V_pad) on device
    out_np = np.asarray(jax.device_get(out))         # single D2H, blocks

    results = []
    off = 0
    for v in Vs:
        vnorm = out_np[0, off:off + v].copy()
        vbnd = out_np[1, off:off + v] > 0.5
        results.append((vnorm, vbnd))
        off += v
    return results


def compute_vertex_metrics(image, vs, epsilon):
    """Single-mesh convenience wrapper."""
    (res,) = compute_vertex_metrics_batched([np.asarray(image, np.float32)],
                                            [np.asarray(vs, np.float32)],
                                            epsilon)
    return res


# --------------------------------------------------------------------------
# Minimal synthetic Mesh (the reference Mesh class is not provided)
# --------------------------------------------------------------------------
class Mesh:
    def __init__(self, vs, edges, image, epsilon=0.05):
        self.vs = np.asarray(vs, np.float32)            # (V, 2)
        self.edges = np.asarray(edges, np.int64)        # (2, E)
        self.image = np.asarray(image, np.float32)      # (V, C)
        self.epsilon = float(epsilon)
        V = self.vs.shape[0]
        self.edge_counts = self.edges.shape[1]
        self.before_pad_vertices = V
        self.vertex_mask = np.ones(V, dtype=bool)
        self.adj_matrix = np.zeros((V, V), dtype=np.int64)
        for e in range(self.edge_counts):
            a, b = int(self.edges[0, e]), int(self.edges[1, e])
            self.adj_matrix[a, b] = 1
        self._vertex_boundary = np.zeros(V, dtype=bool)

    def initiateUpdate(self):
        pass

    def merge_vertex(self, edge_id):
        # collapse v1 into v0 (keeps v0's position / features)
        v0, v1 = int(self.edges[0, edge_id]), int(self.edges[1, edge_id])
        if v0 == v1:
            return None
        self.vertex_mask[v1] = False
        self.adj_matrix[v0, :] |= self.adj_matrix[v1, :]
        self.adj_matrix[:, v0] |= self.adj_matrix[:, v1]
        self.adj_matrix[v1, :] = 0
        self.adj_matrix[:, v1] = 0
        self.adj_matrix[v0, v0] = 0
        self.edges[self.edges == v1] = v0
        self.before_pad_vertices -= 1
        return None

    def clean_up(self):
        pass


# --------------------------------------------------------------------------
# MeshPool (forward semantics of the PyTorch module)
# --------------------------------------------------------------------------
class MeshPool:
    def __init__(self, multi_thread=False):
        # TODO(synk): multi_thread host-threading path omitted (no kernel impact)
        self._multi_thread = multi_thread
        self._meshes = None

    def __call__(self, meshes):
        return self.forward(meshes)

    def forward(self, meshes):
        self.out = []
        self._meshes = meshes

        # Batched TPU hot path: one pallas_call (and one D2H) per (C, epsilon)
        # bucket covering all meshes in the batch.
        buckets = {}
        for idx, mesh in enumerate(meshes):
            key = (int(mesh.image.shape[1]), float(mesh.epsilon))
            buckets.setdefault(key, []).append(idx)

        metrics = [None] * len(meshes)
        for (C, eps), idxs in buckets.items():
            imgs = [np.asarray(meshes[i].image, np.float32) for i in idxs]
            vss = [np.asarray(meshes[i].vs, np.float32) for i in idxs]
            res = compute_vertex_metrics_batched(imgs, vss, eps)
            for i, r in zip(idxs, res):
                metrics[i] = r

        for mesh_index in range(len(meshes)):
            self._pool_main(mesh_index, metrics[mesh_index])
        return self._meshes

    def _pool_main(self, mesh_index, mesh_metrics):
        mesh = self._meshes[mesh_index]
        out_target = mesh.before_pad_vertices // 2
        mesh.initiateUpdate()

        # Kernel-computed per-vertex squared norms + boundary flags.
        vnorm, vbnd = mesh_metrics
        mesh._vertex_boundary = vbnd

        # sum(concat(image[e0], image[e1])^2) == vnorm[e0] + vnorm[e1]
        e0 = np.asarray(mesh.edges[0])
        e1 = np.asarray(mesh.edges[1])
        sqmag = vnorm[e0] + vnorm[e1]

        queue = self._build_queue(sqmag)
        # TODO(synk): sequential heap-pop / edge-collapse loop is inherently
        # data-dependent and stays on host (no clean Pallas equivalent).
        while mesh.before_pad_vertices > out_target and queue:
            value, edge_id = heapq.heappop(queue)
            edge_id = int(edge_id)
            if (mesh.vertex_mask[mesh.edges[1, edge_id]]
                    and mesh.vertex_mask[mesh.edges[0, edge_id]]):
                self._pool_edge(mesh, edge_id)
        mesh.clean_up()

    def _pool_edge(self, mesh, edge_id):
        if self.is_boundary(mesh, edge_id):
            return None
        elif self.is_valid(mesh, edge_id):
            return mesh.merge_vertex(edge_id)
        else:
            return None

    @staticmethod
    def is_valid(mesh, edge_id):
        v0 = int(mesh.edges[0, edge_id])
        v1 = int(mesh.edges[1, edge_id])
        v0_n = mesh.adj_matrix[:, v0] + mesh.adj_matrix[v0]
        v1_n = mesh.adj_matrix[:, v1] + mesh.adj_matrix[v1]
        shared = v0_n & v1_n
        return int(shared.sum()) == 2

    @staticmethod
    def is_boundary(mesh, edge_id):
        # per-vertex flags were computed in the Pallas kernel (vs are static here)
        v0 = int(mesh.edges[0, edge_id])
        v1 = int(mesh.edges[1, edge_id])
        return bool(mesh._vertex_boundary[v0] | mesh._vertex_boundary[v1])

    def _build_queue(self, squared_magnitude):
        heap = [[float(squared_magnitude[i]), float(i)]
                for i in range(squared_magnitude.shape[0])]
        heapq.heapify(heap)
        return heap


# --------------------------------------------------------------------------
# Example: two small triangulated grid meshes (exercises batched launch)
# --------------------------------------------------------------------------
if __name__ == "__main__":
    key = jax.random.PRNGKey(0)

    n = 8            # 8x8 vertex grid -> V = 64 per mesh
    C = 4            # per-vertex feature channels
    coords1d = np.linspace(0.0, 1.0, n, dtype=np.float32)
    grid = np.stack(np.meshgrid(coords1d, coords1d, indexing="ij"), axis=-1)
    vs = grid.reshape(-1, 2)                                  # (64, 2)

    def vid(r, c):
        return r * n + c

    edge_list = []
    for r in range(n):
        for c in range(n):
            if c + 1 < n:
                edge_list.append((vid(r, c), vid(r, c + 1)))
            if r + 1 < n:
                edge_list.append((vid(r, c), vid(r + 1, c)))
            if r + 1 < n and c + 1 < n:
                edge_list.append((vid(r, c), vid(r + 1, c + 1)))
    edges = np.asarray(edge_list, dtype=np.int64).T           # (2, 161)

    V = n * n
    k1, k2 = jax.random.split(key)
    image1 = np.asarray(jax.random.normal(k1, (V, C), dtype=jnp.float32))
    image2 = np.asarray(jax.random.normal(k2, (V, C), dtype=jnp.float32))

    epsilon = 0.05

    # direct correctness check of the batched kernel against a numpy reference
    res = compute_vertex_metrics_batched([image1, image2], [vs, vs], epsilon)
    for image, (vnorm, vbnd) in zip((image1, image2), res):
        ref_vnorm = np.sum(image * image, axis=1)
        ref_vbnd = np.any((vs < epsilon) | (vs > 1.0 - epsilon), axis=1)
        assert np.allclose(vnorm, ref_vnorm, rtol=1e-5, atol=1e-5)
        assert np.array_equal(vbnd, ref_vbnd)

    mesh1 = Mesh(vs, edges.copy(), image1, epsilon=epsilon)
    mesh2 = Mesh(vs, edges.copy(), image2, epsilon=epsilon)
    start_vertices = [mesh1.before_pad_vertices, mesh2.before_pad_vertices]

    pool = MeshPool()
    out_meshes = pool([mesh1, mesh2])

    for out, start in zip(out_meshes, start_vertices):
        assert out.before_pad_vertices <= start
        assert out.vertex_mask.sum() == out.before_pad_vertices
    print("KERNEL_OK")
</pallas_src>

<mosaic_0001>
module attributes {stable_mosaic.version = 11 : i64} {
  func.func @kernel(%arg0: i32, %arg1: memref<6x128xf32, #tpu.memory_space<vmem>>, %arg2: memref<2x128xf32, #tpu.memory_space<vmem>>) attributes {dimension_semantics = [#tpu.dimension_semantics<parallel>], iteration_bounds = array<i64: 1>, scalar_prefetch = 0 : i64, scratch_operands = 0 : i64, tpu.core_type = #tpu.core_type<tc>, window_params = [{transform_indices = @transform_0, window_bounds = array<i64: 6, 128>}, {transform_indices = @transform_1, window_bounds = array<i64: 2, 128>}]} {
    %c0 = arith.constant 0 : index
    %c0_0 = arith.constant 0 : index
    %0 = vector.load %arg1[%c0, %c0_0] : memref<6x128xf32, #tpu.memory_space<vmem>>, vector<6x128xf32>
    %1 = vector.extract_strided_slice %0 {offsets = [0, 0], sizes = [4, 128], strides = [1, 1]} : vector<6x128xf32> to vector<4x128xf32>
    %2 = vector.extract_strided_slice %0 {offsets = [4, 0], sizes = [2, 128], strides = [1, 1]} : vector<6x128xf32> to vector<2x128xf32>
    %3 = arith.mulf %1, %1 : vector<4x128xf32>
    %cst = arith.constant dense<0.000000e+00> : vector<128xf32>
    %4 = vector.multi_reduction <add>, %3, %cst [0] : vector<4x128xf32> to vector<128xf32>
    %5 = vector.shape_cast %4 : vector<128xf32> to vector<1x128xf32>
    %cst_1 = arith.constant 5.000000e-02 : f32
    %6 = vector.broadcast %cst_1 : f32 to vector<2x128xf32>
    %7 = arith.cmpf olt, %2, %6 : vector<2x128xf32>
    %cst_2 = arith.constant 0.949999988 : f32
    %8 = vector.broadcast %cst_2 : f32 to vector<2x128xf32>
    %9 = arith.cmpf ogt, %2, %8 : vector<2x128xf32>
    %10 = arith.ori %7, %9 : vector<2x128xi1>
    %cst_3 = arith.constant 1.000000e+00 : f32
    %cst_4 = arith.constant 0.000000e+00 : f32
    %11 = vector.broadcast %cst_3 : f32 to vector<2x128xf32>
    %12 = vector.broadcast %cst_4 : f32 to vector<2x128xf32>
    %13 = arith.select %10, %11, %12 : vector<2x128xi1>, vector<2x128xf32>
    %cst_5 = arith.constant dense<0xFF800000> : vector<128xf32>
    %14 = vector.multi_reduction <maximumf>, %13, %cst_5 [0] : vector<2x128xf32> to vector<128xf32>
    %cst_6 = arith.constant 0.000000e+00 : f32
    %15 = vector.broadcast %cst_6 : f32 to vector<128xf32>
    %16 = arith.cmpf ogt, %14, %15 : vector<128xf32>
    %17 = vector.shape_cast %16 : vector<128xi1> to vector<1x128xi1>
    %18 = arith.extui %17 : vector<1x128xi1> to vector<1x128xi32>
    %19 = arith.sitofp %18 : vector<1x128xi32> to vector<1x128xf32>
    %20 = tpu.concatenate %5, %19 in 0 : vector<1x128xf32>, vector<1x128xf32> -> vector<2x128xf32>
    %c0_7 = arith.constant 0 : index
    %c0_8 = arith.constant 0 : index
    %21 = vector.load %arg2[%c0_7, %c0_8] : memref<2x128xf32, #tpu.memory_space<vmem>>, vector<2x128xf32>
    tpu.vector_store %arg2[%c0_7, %c0_8], %20 {strides = array<i32>} : memref<2x128xf32, #tpu.memory_space<vmem>>, vector<2x128xf32>,
    return
  }
  func.func @transform_0(%arg0: i32) -> (i32, i32) {
    %c0_i32 = arith.constant 0 : i32
    %c0_i32_0 = arith.constant 0 : i32
    return %c0_i32, %arg0 : i32, i32
  }
  func.func @transform_1(%arg0: i32) -> (i32, i32) {
    %c0_i32 = arith.constant 0 : i32
    %c0_i32_0 = arith.constant 0 : i32
    return %c0_i32, %arg0 : i32, i32
  }
}

</mosaic_0001>

<llo_original>
// kernel: tpu_custom_call.1
$region0: #{tpu_custom_call.1}
  #allocation0 [shape = 'u32[]', space=smem, size = 0x4, offset = 0x4, fixed_abs, tag = 'smem constant byte address 0x4 - core index']
  #allocation1 [shape = 'u32[144,128]{1,0:T(1,128)}', space=vmem, size = 0x12000, scoped, tag = 'internal scratch']
  %s0 = inlined_call_operand.hbm [shape: f32[6,128], index: 0, kind: input, shape index: {}]
  %s1 = inlined_call_operand.hbm [shape: f32[2,128], index: 1, kind: output, shape index: {}]
  %s2 = sld [smem:[#allocation0]]
  $region18: #{tpu_custom_call.1} parent=0
    _
  %s4 = ssub.s32 1, %s2
  %s5 = scalar_select 0, %s4, %s2
  $region1: #{tpu_custom_call.1} parent=0
    #allocation2 [shape = 'u8[4096]{0}', space=vmem, size = 0x1000, scoped, tag = 'input window, operand 0, single buffered']
    #allocation3 [shape = 's32[1]{0}', space=sflag, size = 0x4, scoped, tag = 'scoped memory for tpu_custom_call.1']
    #allocation4 [shape = 's32[1]{0}', space=sflag, size = 0x4, scoped, tag = 'scoped memory for tpu_custom_call.1']
    #allocation5 [shape = 'u8[1024]{0}', space=vmem, size = 0x400, scoped, tag = 'output window, operand 0, single buffered']
    %6 = vsyncpa [#allocation3], 0
    %7 = vsyncpa [#allocation4], 0
    // Predicated region
    $region2: #{tpu_custom_call.1} parent=1 // pred_check
      _
    $region3: #{tpu_custom_call.1} parent=1 // pred_check_branch
      %9 = sbr.rel (0) target = $region5
    $region4: #{tpu_custom_call.1} parent=1 // pred_region
      %s11 = ssub.s32 128, 128
      %12 = vsyncadd [#allocation3], %s11
      %s14 = sshll.u32 [#allocation2], 4
      %s15 = int_to_ptr.vmem [resolvable:$true] %s14
      %17 = dma.hbm_to_vmem [thread:$0]  %s0, 128, %s15, [#allocation3]
    $region5: #{tpu_custom_call.1} parent=1 // pred_fallthru
      _
    // Predicated region
    $region6: #{tpu_custom_call.1} parent=1 // pred_check
      _
    $region7: #{tpu_custom_call.1} parent=1 // pred_check_branch
      %19 = sbr.rel (0) target = $region9
    $region8: #{tpu_custom_call.1} parent=1 // pred_region
      %20 = dma.done [#allocation3], 128
    $region9: #{tpu_custom_call.1} parent=1 // pred_fallthru
      _
    %v21 = vld [vmem:[#allocation2] sm:$0x3f]
    %v22 = vmul.f32 %v21, %v21
    %vm23 = vcmask 1043456
    %v24 = vsel %vm23, %v22, 0.0
    %v25 = vrot.slane %v24, 4
    %v26 = vadd.f32 %v24, %v25
    %v27 = vrot.slane %v26, 2
    %v28 = vadd.f32 %v26, %v27
    %v29 = vrot.slane %v28, 1
    %v30 = vadd.f32 %v28, %v29
    %vm31 = vcmp.lt.f32.partialorder %v21, 0.05
    %vm32 = vcmp.gt.f32.partialorder %v21, 0.95
    %vm33 = vmor %vm31, %vm32
    %v34 = vsel %vm33, 1.0, 0.0
    %vm35 = vcmask 1045508
    %v36 = vsel %vm35, %v34, -inf
    %v37 = vrot.slane %v36, 4
    %v38 = vmax.f32 %v36, %v37
    %v39 = vrot.slane %v38, 2
    %v40 = vmax.f32 %v38, %v39
    %v41 = vrot.slane %v40, 1
    %v42 = vmax.f32 %v40, %v41
    %vm43 = vcmp.gt.f32.partialorder %v42, 0.0
    %v44 = vsel %vm43, 1, 0
    %v45 = vcvt.s32.f32 %v44
    %vm46 = vcmask 1040384
    %v47 = vsel %vm46, %v30, %v45
    %48 = vst [vmem:[#allocation5] sm:$0x3] %v47
    // Predicated region
    $region10: #{tpu_custom_call.1} parent=1 // pred_check
      _
    $region11: #{tpu_custom_call.1} parent=1 // pred_check_branch
      %50 = sbr.rel (0) target = $region13
    $region12: #{tpu_custom_call.1} parent=1 // pred_region
      %s52 = ssub.s32 32, 32
      %53 = vsyncadd [#allocation4], %s52
      %s55 = sshll.u32 [#allocation5], 4
      %s56 = int_to_ptr.vmem [resolvable:$true] %s55
      %58 = dma.vmem_to_hbm [thread:$0]  %s56, 32, %s1, [#allocation4]
    $region13: #{tpu_custom_call.1} parent=1 // pred_fallthru
      _
    // Predicated region
    $region14: #{tpu_custom_call.1} parent=1 // pred_check
      _
    $region15: #{tpu_custom_call.1} parent=1 // pred_check_branch
      %60 = sbr.rel (0) target = $region17
    $region16: #{tpu_custom_call.1} parent=1 // pred_region
      %61 = dma.done [#allocation4], 32
    $region17: #{tpu_custom_call.1} parent=1 // pred_fallthru
      _
    %62 = vsyncpa [#allocation3], 1
    %63 = vsyncpa [#allocation4], 1

</llo_original>
